<compile_context>
chip_gen: v7x
topology: tpu7x:2x2x1
jax: 0.10.0
libtpu: 0.0.40
codegen_flags: <defaults>
</compile_context>

<pallas_src>
import functools

import jax
import jax.numpy as jnp
from jax.experimental import pallas as pl
from jax.experimental.pallas import tpu as pltpu

HID_SIZE = 32
N_SLOTS = 2
LANE = 128
DEFAULT_BLOCK_B = 512  # batch rows per grid step (lane-dense, fits VMEM easily)


def actor_kernel(xT_ref, w1_ref, b1_ref, w2_ref, b2_ref, o_ref):
    """One batch tile, batch on the lane axis throughout.

    xT_ref : (ob_len, block_b)   input tile, transposed (batch on lanes)
    w1_ref : (hid, ob_len)       PyTorch affine1.weight layout (out, in)
    b1_ref : (hid, 1)
    w2_ref : (n_slots, hid)      PyTorch affine2.weight layout
    b2_ref : (n_slots, 1)
    o_ref  : (n_slots, block_b)  softmax probabilities, transposed
    """
    # ---- affine1 + ReLU: (hid, ob_len) @ (ob_len, B) -> (hid, B) ----
    h = jnp.dot(w1_ref[...], xT_ref[...], preferred_element_type=jnp.float32)
    h = jnp.maximum(h + b1_ref[...], 0.0)          # (hid,1) broadcasts over lanes

    # ---- affine2: (n_slots, hid) @ (hid, B) -> (n_slots, B) ----
    logits = jnp.dot(w2_ref[...], h, preferred_element_type=jnp.float32)
    logits = logits + b2_ref[...]

    # ---- 2-class softmax, specialized along the tiny sublane (class) axis ----
    # Avoids cross-lane XLU reductions entirely: just sublane selects, VPU
    # max/sub/add, EUP exp, and a reciprocal instead of a divide.
    l0 = logits[0:1, :]
    l1 = logits[1:2, :]
    m = jnp.maximum(l0, l1)
    e0 = jnp.exp(l0 - m)
    e1 = jnp.exp(l1 - m)
    # approx=True would push the reciprocal fully onto the idle EUP slot; kept
    # exact here so the 1e-5 self-test tolerance holds.
    inv = pl.reciprocal(e0 + e1, approx=False)
    o_ref[...] = jnp.concatenate([e0 * inv, e1 * inv], axis=0)


def _round_up(n, m):
    return ((n + m - 1) // m) * m


@functools.partial(jax.jit, static_argnames=("block_b_max",))
def actor_forward(x, w1, b1, w2, b2, *, block_b_max=DEFAULT_BLOCK_B):
    """x: (B, ob_len) f32; returns (B, N_SLOTS) f32 softmax probabilities."""
    B, ob_len = x.shape
    hid = w1.shape[0]
    n_slots = w2.shape[0]
    assert n_slots == N_SLOTS, "softmax path is specialized for 2 classes"

    # Lane-dense batch tile: multiple of 128 lanes, capped at block_b_max.
    block_b = min(block_b_max, _round_up(B, LANE))
    Bp = _round_up(B, block_b)

    # Layout plumbing in the thin wrapper: put batch on the lane axis and pad
    # the ragged tail with zeros (finite softmax; sliced off below).
    xT = jnp.pad(x.T, ((0, 0), (0, Bp - B)))       # (ob_len, Bp)

    out_t = pl.pallas_call(
        actor_kernel,
        out_shape=jax.ShapeDtypeStruct((n_slots, Bp), jnp.float32),
        grid=(Bp // block_b,),
        in_specs=[
            pl.BlockSpec((ob_len, block_b), lambda i: (0, i)),   # streamed x tile
            pl.BlockSpec((hid, ob_len),     lambda i: (0, 0)),   # weights resident
            pl.BlockSpec((hid, 1),          lambda i: (0, 0)),
            pl.BlockSpec((n_slots, hid),    lambda i: (0, 0)),
            pl.BlockSpec((n_slots, 1),      lambda i: (0, 0)),
        ],
        out_specs=pl.BlockSpec((n_slots, block_b), lambda i: (0, i)),
        compiler_params=pltpu.CompilerParams(
            # Independent batch tiles: shard across v7x's 2 TensorCores;
            # measured near-no-op on single-TC v5e/v6e.
            dimension_semantics=("parallel",),
        ),
    )(xT, w1, b1, w2, b2)

    return out_t[:, :B].T                           # (B, n_slots)


def init_actor_params(key, ob_len, hid=HID_SIZE, n_slots=N_SLOTS):
    """nn.Linear-style U(-1/sqrt(fan_in), 1/sqrt(fan_in)) init.
    Weights kept in PyTorch (out_features, in_features) layout; biases stored
    as (out_features, 1) columns so they broadcast over the lane/batch axis."""
    k1, k2, k3, k4 = jax.random.split(key, 4)
    bound1 = 1.0 / jnp.sqrt(ob_len)
    bound2 = 1.0 / jnp.sqrt(hid)
    w1 = jax.random.uniform(k1, (hid, ob_len), jnp.float32, -bound1, bound1)
    b1 = jax.random.uniform(k2, (hid, 1), jnp.float32, -bound1, bound1)
    w2 = jax.random.uniform(k3, (n_slots, hid), jnp.float32, -bound2, bound2)
    b2 = jax.random.uniform(k4, (n_slots, 1), jnp.float32, -bound2, bound2)
    return w1, b1, w2, b2


def actor_reference(x, w1, b1, w2, b2):
    """Plain-JAX reference of the PyTorch forward pass (weights in (out,in))."""
    h = jnp.maximum(x @ w1.T + b1[:, 0], 0.0)
    logits = h @ w2.T + b2[:, 0]
    return jax.nn.softmax(logits, axis=-1)


if __name__ == "__main__":
    key = jax.random.PRNGKey(0)
    kx_small, kx_big, kp = jax.random.split(key, 3)

    ob_len = 8  # small observation length
    w1, b1, w2, b2 = init_actor_params(kp, ob_len)

    # --- small case (per-step usage, B=2): pads to one 128-lane tile ---
    x_small = jax.random.normal(kx_small, (2, ob_len), jnp.float32)
    out_small = jax.block_until_ready(actor_forward(x_small, w1, b1, w2, b2))
    ref_small = actor_reference(x_small, w1, b1, w2, b2)
    assert out_small.shape == (2, N_SLOTS)
    assert jnp.allclose(out_small, ref_small, atol=1e-5, rtol=1e-5), "mismatch (small)"
    assert jnp.allclose(jnp.sum(out_small, axis=-1), 1.0, atol=1e-5)

    # --- batched case (ragged B=1000): 2 grid tiles of 512 + tail padding ---
    x_big = jax.random.normal(kx_big, (1000, ob_len), jnp.float32)
    out_big = jax.block_until_ready(actor_forward(x_big, w1, b1, w2, b2))
    ref_big = actor_reference(x_big, w1, b1, w2, b2)
    assert out_big.shape == (1000, N_SLOTS)
    assert jnp.allclose(out_big, ref_big, atol=1e-5, rtol=1e-5), "mismatch (batched)"
    assert jnp.allclose(jnp.sum(out_big, axis=-1), 1.0, atol=1e-5)

    print("KERNEL_OK")
</pallas_src>

<mosaic_0001>
module attributes {stable_mosaic.version = 11 : i64} {
  func.func @actor_kernel(%arg0: i32, %arg1: memref<8x128xf32, #tpu.memory_space<vmem>>, %arg2: memref<32x8xf32, #tpu.memory_space<vmem>>, %arg3: memref<32x1xf32, #tpu.memory_space<vmem>>, %arg4: memref<2x32xf32, #tpu.memory_space<vmem>>, %arg5: memref<2x1xf32, #tpu.memory_space<vmem>>, %arg6: memref<2x128xf32, #tpu.memory_space<vmem>>) attributes {dimension_semantics = [#tpu.dimension_semantics<parallel>], iteration_bounds = array<i64: 1>, scalar_prefetch = 0 : i64, scratch_operands = 0 : i64, tpu.core_type = #tpu.core_type<tc>, window_params = [{transform_indices = @transform_0, window_bounds = array<i64: 8, 128>}, {pipeline_mode = #tpu.pipeline_mode<synchronous>, transform_indices = @transform_1, window_bounds = array<i64: 32, 8>}, {pipeline_mode = #tpu.pipeline_mode<synchronous>, transform_indices = @transform_2, window_bounds = array<i64: 32, 1>}, {pipeline_mode = #tpu.pipeline_mode<synchronous>, transform_indices = @transform_3, window_bounds = array<i64: 2, 32>}, {pipeline_mode = #tpu.pipeline_mode<synchronous>, transform_indices = @transform_4, window_bounds = array<i64: 2, 1>}, {transform_indices = @transform_5, window_bounds = array<i64: 2, 128>}]} {
    %c0 = arith.constant 0 : index
    %c0_0 = arith.constant 0 : index
    %0 = vector.load %arg2[%c0, %c0_0] : memref<32x8xf32, #tpu.memory_space<vmem>>, vector<32x8xf32>
    %c0_1 = arith.constant 0 : index
    %c0_2 = arith.constant 0 : index
    %1 = vector.load %arg1[%c0_1, %c0_2] : memref<8x128xf32, #tpu.memory_space<vmem>>, vector<8x128xf32>
    %cst = arith.constant dense<0.000000e+00> : vector<32x128xf32>
    %2 = tpu.matmul %0, %1, %cst {dimension_numbers = #tpu.dot_dimension_numbers<[1], [0], [0], [1], [0, 0, 1, 1], [], []>} : vector<32x8xf32>, vector<8x128xf32>, vector<32x128xf32> -> vector<32x128xf32>
    %c0_3 = arith.constant 0 : index
    %c0_4 = arith.constant 0 : index
    %3 = vector.load %arg3[%c0_3, %c0_4] : memref<32x1xf32, #tpu.memory_space<vmem>>, vector<32x1xf32>
    %4 = vector.broadcast %3 : vector<32x1xf32> to vector<32x128xf32>
    %5 = arith.addf %2, %4 : vector<32x128xf32>
    %cst_5 = arith.constant 0.000000e+00 : f32
    %6 = vector.broadcast %cst_5 : f32 to vector<32x128xf32>
    %7 = arith.maximumf %5, %6 : vector<32x128xf32>
    %c0_6 = arith.constant 0 : index
    %c0_7 = arith.constant 0 : index
    %8 = vector.load %arg4[%c0_6, %c0_7] : memref<2x32xf32, #tpu.memory_space<vmem>>, vector<2x32xf32>
    %cst_8 = arith.constant dense<0.000000e+00> : vector<2x128xf32>
    %9 = tpu.matmul %8, %7, %cst_8 {dimension_numbers = #tpu.dot_dimension_numbers<[1], [0], [0], [1], [0, 0, 1, 1], [], []>} : vector<2x32xf32>, vector<32x128xf32>, vector<2x128xf32> -> vector<2x128xf32>
    %c0_9 = arith.constant 0 : index
    %c0_10 = arith.constant 0 : index
    %10 = vector.load %arg5[%c0_9, %c0_10] : memref<2x1xf32, #tpu.memory_space<vmem>>, vector<2x1xf32>
    %11 = vector.broadcast %10 : vector<2x1xf32> to vector<2x128xf32>
    %12 = arith.addf %9, %11 : vector<2x128xf32>
    %13 = vector.extract_strided_slice %12 {offsets = [0, 0], sizes = [1, 128], strides = [1, 1]} : vector<2x128xf32> to vector<1x128xf32>
    %14 = vector.extract_strided_slice %12 {offsets = [1, 0], sizes = [1, 128], strides = [1, 1]} : vector<2x128xf32> to vector<1x128xf32>
    %15 = arith.maximumf %13, %14 : vector<1x128xf32>
    %16 = arith.subf %13, %15 : vector<1x128xf32>
    %17 = math.exp %16 : vector<1x128xf32>
    %18 = arith.subf %14, %15 : vector<1x128xf32>
    %19 = math.exp %18 : vector<1x128xf32>
    %20 = arith.addf %17, %19 : vector<1x128xf32>
    %21 = tpu.reciprocal %20 : vector<1x128xf32> -> vector<1x128xf32>
    %22 = arith.mulf %17, %21 : vector<1x128xf32>
    %23 = arith.mulf %19, %21 : vector<1x128xf32>
    %24 = tpu.concatenate %22, %23 in 0 : vector<1x128xf32>, vector<1x128xf32> -> vector<2x128xf32>
    %c0_11 = arith.constant 0 : index
    %c0_12 = arith.constant 0 : index
    %25 = vector.load %arg6[%c0_11, %c0_12] : memref<2x128xf32, #tpu.memory_space<vmem>>, vector<2x128xf32>
    tpu.vector_store %arg6[%c0_11, %c0_12], %24 {strides = array<i32>} : memref<2x128xf32, #tpu.memory_space<vmem>>, vector<2x128xf32>,
    return
  }
  func.func @transform_0(%arg0: i32) -> (i32, i32) {
    %c0_i32 = arith.constant 0 : i32
    %c0_i32_0 = arith.constant 0 : i32
    return %c0_i32, %arg0 : i32, i32
  }
  func.func @transform_1(%arg0: i32) -> (i32, i32) {
    %c0_i32 = arith.constant 0 : i32
    %c0_i32_0 = arith.constant 0 : i32
    %c0_i32_1 = arith.constant 0 : i32
    return %c0_i32, %c0_i32_0 : i32, i32
  }
  func.func @transform_2(%arg0: i32) -> (i32, i32) {
    %c0_i32 = arith.constant 0 : i32
    %c0_i32_0 = arith.constant 0 : i32
    %c0_i32_1 = arith.constant 0 : i32
    return %c0_i32, %c0_i32_0 : i32, i32
  }
  func.func @transform_3(%arg0: i32) -> (i32, i32) {
    %c0_i32 = arith.constant 0 : i32
    %c0_i32_0 = arith.constant 0 : i32
    %c0_i32_1 = arith.constant 0 : i32
    return %c0_i32, %c0_i32_0 : i32, i32
  }
  func.func @transform_4(%arg0: i32) -> (i32, i32) {
    %c0_i32 = arith.constant 0 : i32
    %c0_i32_0 = arith.constant 0 : i32
    %c0_i32_1 = arith.constant 0 : i32
    return %c0_i32, %c0_i32_0 : i32, i32
  }
  func.func @transform_5(%arg0: i32) -> (i32, i32) {
    %c0_i32 = arith.constant 0 : i32
    %c0_i32_0 = arith.constant 0 : i32
    return %c0_i32, %arg0 : i32, i32
  }
}

</mosaic_0001>

<llo_original>
// kernel: actor_forward.1
$region0: #{actor_forward.1}
  #allocation0 [shape = 'u32[]', space=smem, size = 0x4, offset = 0x4, fixed_abs, tag = 'smem constant byte address 0x4 - core index']
  #allocation1 [shape = 'u32[144,128]{1,0:T(1,128)}', space=vmem, size = 0x12000, scoped, tag = 'internal scratch']
  %s0 = inlined_call_operand.vmem [shape: f32[8,128], index: 0, kind: input, shape index: {}]
  %s1 = inlined_call_operand.vmem [shape: f32[32,8], index: 1, kind: input, shape index: {}]
  %s2 = inlined_call_operand.vmem [shape: f32[32,1], index: 2, kind: input, shape index: {}]
  %s3 = inlined_call_operand.vmem [shape: f32[2,32], index: 3, kind: input, shape index: {}]
  %s4 = inlined_call_operand.vmem [shape: f32[2,1], index: 4, kind: input, shape index: {}]
  %s5 = inlined_call_operand.vmem [shape: f32[2,128], index: 5, kind: output, shape index: {}]
  %s6 = sld [smem:[#allocation0]]
  $region30: #{actor_forward.1} parent=0
    _
  %s8 = ssub.s32 1, %s6
  %s9 = scalar_select 0, %s8, %s6
  // Predicated region
  $region2: #{actor_forward.1} parent=0 // pred_check
    _
  $region3: #{actor_forward.1} parent=0 // pred_check_branch
    %11 = sbr.rel (0) target = $region5
  $region4: #{actor_forward.1} parent=0 // pred_region
    _
  $region5: #{actor_forward.1} parent=0 // pred_fallthru
    _
  // Predicated region
  $region6: #{actor_forward.1} parent=0 // pred_check
    _
  $region7: #{actor_forward.1} parent=0 // pred_check_branch
    %13 = sbr.rel (0) target = $region9
  $region8: #{actor_forward.1} parent=0 // pred_region
    _
  $region9: #{actor_forward.1} parent=0 // pred_fallthru
    _
  // Predicated region
  $region10: #{actor_forward.1} parent=0 // pred_check
    _
  $region11: #{actor_forward.1} parent=0 // pred_check_branch
    %15 = sbr.rel (0) target = $region13
  $region12: #{actor_forward.1} parent=0 // pred_region
    _
  $region13: #{actor_forward.1} parent=0 // pred_fallthru
    _
  // Predicated region
  $region14: #{actor_forward.1} parent=0 // pred_check
    _
  $region15: #{actor_forward.1} parent=0 // pred_check_branch
    %17 = sbr.rel (0) target = $region17
  $region16: #{actor_forward.1} parent=0 // pred_region
    _
  $region17: #{actor_forward.1} parent=0 // pred_fallthru
    _
  // Predicated region
  $region18: #{actor_forward.1} parent=0 // pred_check
    _
  $region19: #{actor_forward.1} parent=0 // pred_check_branch
    %19 = sbr.rel (0) target = $region21
  $region20: #{actor_forward.1} parent=0 // pred_region
    _
  $region21: #{actor_forward.1} parent=0 // pred_fallthru
    _
  %v20 = vld [vmem:[%s1] sm:$0xff]
  %v21 = vld [vmem:[%s1 + $0x8] sm:$0xff]
  %v22 = vld [vmem:[%s1 + $0x10] sm:$0xff]
  %v23 = vld [vmem:[%s1 + $0x18] sm:$0xff]
  %v24 = vld [vmem:[%s0] sm:$0xff]
  %v25 = vld [vmem:[%s2] sm:$0xff]
  %v26 = vld [vmem:[%s2 + $0x8] sm:$0xff]
  %v27 = vld [vmem:[%s2 + $0x10] sm:$0xff]
  %v28 = vld [vmem:[%s2 + $0x18] sm:$0xff]
  %30 = vset.pattern.permute.xlu0 0
  %31 = vperm.xlu0 %30, %v25
  %v32 = vpop.permute.xlu0 %31
  %35 = vset.pattern.permute.xlu0 0
  %36 = vperm.xlu0 %35, %v26
  %v37 = vpop.permute.xlu0 %36
  %40 = vset.pattern.permute.xlu0 0
  %41 = vperm.xlu0 %40, %v27
  %v42 = vpop.permute.xlu0 %41
  %45 = vset.pattern.permute.xlu0 0
  %46 = vperm.xlu0 %45, %v28
  %v47 = vpop.permute.xlu0 %46
  %vm49 = vcmask 64512
  %v51 = vsel %vm49, %v20, 0
  %v54 = vsel %vm49, %v21, 0
  %v57 = vsel %vm49, %v22, 0
  %v60 = vsel %vm49, %v23, 0
  %62 = vmatprep.subr.mxu0 0.0
  %63 = vmatpush1.msra.mxu0 %v24
  %64 = vmatprep.subr.mxu0 0.0
  %65 = vmatpush1.msra.mxu0 0.0
  %66 = vmatprep.subr.mxu0 0.0
  %67 = vmatpush1.msra.mxu0 0.0
  %68 = vmatprep.subr.mxu0 0.0
  %69 = vmatpush1.msra.mxu0 0.0
  %70 = vmatprep.subr.mxu0 0.0
  %71 = vmatpush1.msra.mxu0 0.0
  %72 = vmatprep.subr.mxu0 0.0
  %73 = vmatpush1.msra.mxu0 0.0
  %74 = vmatprep.subr.mxu0 0.0
  %75 = vmatpush1.msra.mxu0 0.0
  %76 = vmatprep.subr.mxu0 0.0
  %77 = vmatpush1.msra.mxu0 0.0
  %78 = vmatprep.subr.mxu0 0.0
  %79 = vmatpush1.msra.mxu0 0.0
  %80 = vmatprep.subr.mxu0 0.0
  %81 = vmatpush1.msra.mxu0 0.0
  %82 = vmatprep.subr.mxu0 0.0
  %83 = vmatpush1.msra.mxu0 0.0
  %84 = vmatprep.subr.mxu0 0.0
  %85 = vmatpush1.msra.mxu0 0.0
  %86 = vmatprep.subr.mxu0 0.0
  %87 = vmatpush1.msra.mxu0 0.0
  %88 = vmatprep.subr.mxu0 0.0
  %89 = vmatpush1.msra.mxu0 0.0
  %90 = vmatprep.subr.mxu0 0.0
  %91 = vmatpush1.msra.mxu0 0.0
  %92 = vmatprep.subr.mxu0 0.0
  %93 = vmatpush1.msra.mxu0 0.0
  %94 = vmatprep.subr.mxu0 0.0
  %95 = vmatpush1.msra.mxu0 0.0
  %96 = vmatprep.subr.mxu0 0.0
  %97 = vmatpush1.msra.mxu0 0.0
  %98 = vmatprep.subr.mxu0 0.0
  %99 = vmatpush1.msra.mxu0 0.0
  %100 = vmatprep.subr.mxu0 0.0
  %101 = vmatpush1.msra.mxu0 0.0
  %102 = vmatprep.subr.mxu0 0.0
  %103 = vmatpush1.msra.mxu0 0.0
  %104 = vmatprep.subr.mxu0 0.0
  %105 = vmatpush1.msra.mxu0 0.0
  %106 = vmatprep.subr.mxu0 0.0
  %107 = vmatpush1.msra.mxu0 0.0
  %108 = vmatprep.subr.mxu0 0.0
  %109 = vmatpush1.msra.mxu0 0.0
  %110 = vmatprep.subr.mxu0 0.0
  %111 = vmatpush1.msra.mxu0 0.0
  %112 = vmatprep.subr.mxu0 0.0
  %113 = vmatpush1.msra.mxu0 0.0
  %114 = vmatprep.subr.mxu0 0.0
  %115 = vmatpush1.msra.mxu0 0.0
  %116 = vmatprep.subr.mxu0 0.0
  %117 = vmatpush1.msra.mxu0 0.0
  %118 = vmatprep.subr.mxu0 0.0
  %119 = vmatpush1.msra.mxu0 0.0
  %120 = vmatprep.subr.mxu0 0.0
  %121 = vmatpush1.msra.mxu0 0.0
  %122 = vmatprep.subr.mxu0 0.0
  %123 = vmatpush1.msra.mxu0 0.0
  %124 = vmatprep.subr.mxu0 0.0
  %125 = vmatpush1.msra.mxu0 0.0
  %126 = vmatprep.mubr.f32.mxu0 0.0
  %127 = vmatmul.mubr.f32.gmra.mrb[0].mxu0 %v51
  %v128 = vpop.f32.mrb[0].mxu0
  %v129 = vadd.f32 %v32, %v128
  %v130 = vpop.f32.mrb[0].mxu0
  %131 = vmatprep.mubr.f32.mxu0 0.0
  %132 = vmatmul.mubr.f32.gmra.mrb[0].mxu0 %v54
  %v133 = vpop.f32.mrb[0].mxu0
  %v134 = vadd.f32 %v37, %v133
  %v135 = vpop.f32.mrb[0].mxu0
  %136 = vmatprep.mubr.f32.mxu0 0.0
  %137 = vmatmul.mubr.f32.gmra.mrb[0].mxu0 %v57
  %v138 = vpop.f32.mrb[0].mxu0
  %v139 = vadd.f32 %v42, %v138
  %v140 = vpop.f32.mrb[0].mxu0
  %141 = vmatprep.mubr.f32.mxu0 0.0
  %142 = vmatmul.mubr.f32.gmra.mrb[0].mxu0 %v60
  %v143 = vpop.f32.mrb[0].mxu0
  %v144 = vadd.f32 %v47, %v143
  %v145 = vpop.f32.mrb[0].mxu0
  %146 = vdwg.mxu0
  %v147 = vmax.f32 %v129, 0.0
  %v148 = vmax.f32 %v134, 0.0
  %v149 = vmax.f32 %v139, 0.0
  %v150 = vmax.f32 %v144, 0.0
  %v151 = vld [vmem:[%s3] sm:$0x3]
  %v152 = vld [vmem:[%s4] sm:$0x3]
  %154 = vset.pattern.permute.xlu0 0
  %155 = vperm.xlu0 %154, %v152
  %v156 = vpop.permute.xlu0 %155
  %vm158 = vcmask 261120
  %v160 = vsel %vm158, %v151, 0
  %162 = vmatprep.subr.mxu0 0.0
  %163 = vmatpush1.msra.mxu0 %v147
  %164 = vmatprep.subr.mxu0 0.0
  %165 = vmatpush1.msra.mxu0 %v148
  %166 = vmatprep.subr.mxu0 0.0
  %167 = vmatpush1.msra.mxu0 %v149
  %168 = vmatprep.subr.mxu0 0.0
  %169 = vmatpush1.msra.mxu0 %v150
  %170 = vmatprep.subr.mxu0 0.0
  %171 = vmatpush1.msra.mxu0 0.0
  %172 = vmatprep.subr.mxu0 0.0
  %173 = vmatpush1.msra.mxu0 0.0
  %174 = vmatprep.subr.mxu0 0.0
  %175 = vmatpush1.msra.mxu0 0.0
  %176 = vmatprep.subr.mxu0 0.0
  %177 = vmatpush1.msra.mxu0 0.0
  %178 = vmatprep.subr.mxu0 0.0
  %179 = vmatpush1.msra.mxu0 0.0
  %180 = vmatprep.subr.mxu0 0.0
  %181 = vmatpush1.msra.mxu0 0.0
  %182 = vmatprep.subr.mxu0 0.0
  %183 = vmatpush1.msra.mxu0 0.0
  %184 = vmatprep.subr.mxu0 0.0
  %185 = vmatpush1.msra.mxu0 0.0
  %186 = vmatprep.subr.mxu0 0.0
  %187 = vmatpush1.msra.mxu0 0.0
  %188 = vmatprep.subr.mxu0 0.0
  %189 = vmatpush1.msra.mxu0 0.0
  %190 = vmatprep.subr.mxu0 0.0
  %191 = vmatpush1.msra.mxu0 0.0
  %192 = vmatprep.subr.mxu0 0.0
  %193 = vmatpush1.msra.mxu0 0.0
  %194 = vmatprep.subr.mxu0 0.0
  %195 = vmatpush1.msra.mxu0 0.0
  %196 = vmatprep.subr.mxu0 0.0
  %197 = vmatpush1.msra.mxu0 0.0
  %198 = vmatprep.subr.mxu0 0.0
  %199 = vmatpush1.msra.mxu0 0.0
  %200 = vmatprep.subr.mxu0 0.0
  %201 = vmatpush1.msra.mxu0 0.0
  %202 = vmatprep.subr.mxu0 0.0
  %203 = vmatpush1.msra.mxu0 0.0
  %204 = vmatprep.subr.mxu0 0.0
  %205 = vmatpush1.msra.mxu0 0.0
  %206 = vmatprep.subr.mxu0 0.0
  %207 = vmatpush1.msra.mxu0 0.0
  %208 = vmatprep.subr.mxu0 0.0
  %209 = vmatpush1.msra.mxu0 0.0
  %210 = vmatprep.subr.mxu0 0.0
  %211 = vmatpush1.msra.mxu0 0.0
  %212 = vmatprep.subr.mxu0 0.0
  %213 = vmatpush1.msra.mxu0 0.0
  %214 = vmatprep.subr.mxu0 0.0
  %215 = vmatpush1.msra.mxu0 0.0
  %216 = vmatprep.subr.mxu0 0.0
  %217 = vmatpush1.msra.mxu0 0.0
  %218 = vmatprep.subr.mxu0 0.0
  %219 = vmatpush1.msra.mxu0 0.0
  %220 = vmatprep.subr.mxu0 0.0
  %221 = vmatpush1.msra.mxu0 0.0
  %222 = vmatprep.subr.mxu0 0.0
  %223 = vmatpush1.msra.mxu0 0.0
  %224 = vmatprep.subr.mxu0 0.0
  %225 = vmatpush1.msra.mxu0 0.0
  %226 = vmatprep.mubr.f32.mxu0 0.0
  %227 = vmatmul.mubr.f32.gmra.mrb[0].mxu0 %v160
  %v228 = vpop.f32.mrb[0].mxu0
  %v229 = vadd.f32 %v156, %v228
  %v230 = vpop.f32.mrb[0].mxu0
  %231 = vdwg.mxu0
  %v233 = vrot.slane %v229, 1
  %v235 = vmax.f32 %v229, %v233
  %v236 = vsub.f32 %v229, %v235
  %v237 = vmul.f32 %v236, 1.442695
  %v238 = vpow.pop %v237
  %v240 = vrot.slane %v235, 7
  %v242 = vsub.f32 %v229, %v240
  %v243 = vmul.f32 %v242, 1.442695
  %v244 = vpow.pop %v243
  %v246 = vrot.slane %v244, 1
  %v248 = vadd.f32 %v238, %v246
  %v249 = vrcp.pop %v248
  %v250 = vmul.f32 %v238, %v249
  %v252 = vrot.slane %v249, 7
  %v254 = vmul.f32 %v244, %v252
  %vm255 = vcmask 1040384
  %v256 = vsel %vm255, %v250, %v254
  %257 = vst [vmem:[%s5] sm:$0x3] %v256
  // Predicated region
  $region22: #{actor_forward.1} parent=0 // pred_check
    _
  $region23: #{actor_forward.1} parent=0 // pred_check_branch
    %259 = sbr.rel (0) target = $region25
  $region24: #{actor_forward.1} parent=0 // pred_region
    _
  $region25: #{actor_forward.1} parent=0 // pred_fallthru
    _
  // Predicated region
  $region26: #{actor_forward.1} parent=0 // pred_check
    _
  $region27: #{actor_forward.1} parent=0 // pred_check_branch
    %261 = sbr.rel (0) target = $region29
  $region28: #{actor_forward.1} parent=0 // pred_region
    _
  $region29: #{actor_forward.1} parent=0 // pred_fallthru
    _

</llo_original>
